<compile_context>
chip_gen: v7x
topology: tpu7x:2x2x1
jax: 0.10.0
libtpu: 0.0.40
codegen_flags: <defaults>
</compile_context>

<pallas_src>
import functools

import numpy as np
import jax
import jax.numpy as jnp
from jax.experimental import pallas as pl
from jax.experimental.pallas import tpu as pltpu

LANES = 128
MAX_BLOCK_ROWS = 2048      # (2048, 128) f32 tile = 1 MiB; 3 inputs x 2 buffers = 6 MiB
NUM_CORES = 2              # v7x 2-TensorCore split; harmless (serial) on v5e/v6e
N_BINS_DEFAULT = 15


def _bin_boundaries(n_bins):
    # Same values torch.linspace(0, 1, n_bins + 1) produces (as float32).
    b = np.linspace(0.0, 1.0, n_bins + 1).astype(np.float32)
    return [float(v) for v in b]


def _ece_kernel(conf_ref, pred_ref, lab_ref, out_ref, *,
                boundaries, n_valid, block_rows, blocks_per_core, need_mask):
    core = pl.program_id(0)           # parallel axis (megacore on v7x)
    step = pl.program_id(1)           # arbitrary reduction axis

    @pl.when(step == 0)
    def _init():
        out_ref[...] = jnp.zeros_like(out_ref)

    conf = conf_ref[...]                                             # (block_rows, 128) f32
    correct = (pred_ref[...] == lab_ref[...]).astype(jnp.float32)    # accuracies

    if need_mask:
        # Validity mask for the ragged tail / clamped duplicate blocks:
        # invalid samples get confidence -1.0 and fall in no bin.
        blk = core * blocks_per_core + step
        base = blk * (block_rows * LANES)
        row = jax.lax.broadcasted_iota(jnp.int32, conf.shape, 0)
        lane = jax.lax.broadcasted_iota(jnp.int32, conf.shape, 1)
        idx = base + row * LANES + lane
        conf = jnp.where(idx < n_valid, conf, -1.0)

    d = conf - correct                                               # per-sample (conf - acc)

    # Shared boundary compares: in_bin_b = (conf > lo_b) & !(conf > hi_b)  ==  (lo, hi]
    gt = [conf > b for b in boundaries]
    n_bins = len(boundaries) - 1
    rows_out = []
    for b in range(n_bins):
        in_bin = jnp.logical_and(gt[b], jnp.logical_not(gt[b + 1]))
        rows_out.append(jnp.sum(jnp.where(in_bin, d, 0.0), axis=0, keepdims=True))  # (1,128)
    nb_pad = out_ref.shape[0]
    if nb_pad > n_bins:
        rows_out.append(jnp.zeros((nb_pad - n_bins, LANES), jnp.float32))

    # One full-tile accumulator update per step (no per-row masked RMWs).
    out_ref[...] = out_ref[...] + jnp.concatenate(rows_out, axis=0)


def ece_pallas(confidences, predictions, labels, n_bins=N_BINS_DEFAULT):
    n = int(confidences.shape[0])
    boundaries = _bin_boundaries(n_bins)
    nb_pad = max(8, ((n_bins + 7) // 8) * 8)     # sublane-pad the per-bin rows

    conf = confidences.astype(jnp.float32)
    preds = predictions.astype(jnp.int32)
    labs = labels.astype(jnp.int32)

    # Zero-copy path when N is lane aligned (reshape is a bitcast); otherwise a
    # minimal <=127-element pad.  Pad values are irrelevant: the in-kernel
    # validity mask (idx < n) removes them.
    rem = (-n) % LANES
    if rem:
        conf = jnp.pad(conf, (0, rem))
        preds = jnp.pad(preds, (0, rem))
        labs = jnp.pad(labs, (0, rem))
    rows = (n + rem) // LANES
    conf = conf.reshape(rows, LANES)
    preds = preds.reshape(rows, LANES)
    labs = labs.reshape(rows, LANES)

    block_rows = rows if rows <= MAX_BLOCK_ROWS else MAX_BLOCK_ROWS
    num_blocks = pl.cdiv(rows, block_rows)
    blocks_per_core = pl.cdiv(num_blocks, NUM_CORES)
    covered = NUM_CORES * blocks_per_core * block_rows * LANES
    need_mask = covered != n          # skip mask ops entirely when fully aligned

    def in_map(c, i):
        # Clamp so the DMA never sees an out-of-range block index; the in-kernel
        # mask (computed from the UNclamped grid indices) zeroes duplicates.
        return (jnp.minimum(c * blocks_per_core + i, num_blocks - 1), 0)

    in_spec = pl.BlockSpec((block_rows, LANES), in_map)
    # Per-core output block = per-bin, per-lane partial diff sums.  Constant
    # index across the reduction axis -> resident accumulator; distinct per
    # core -> no cross-core race on v7x.
    out_spec = pl.BlockSpec((None, nb_pad, LANES), lambda c, i: (c, 0, 0))

    kernel = functools.partial(
        _ece_kernel, boundaries=boundaries, n_valid=n,
        block_rows=block_rows, blocks_per_core=blocks_per_core,
        need_mask=need_mask)

    partials = pl.pallas_call(
        kernel,
        out_shape=jax.ShapeDtypeStruct((NUM_CORES, nb_pad, LANES), jnp.float32),
        grid_spec=pltpu.PrefetchScalarGridSpec(
            num_scalar_prefetch=0,
            grid=(NUM_CORES, blocks_per_core),
            in_specs=[in_spec, in_spec, in_spec],
            out_specs=out_spec),
        compiler_params=pltpu.CompilerParams(
            dimension_semantics=("parallel", "arbitrary")),
    )(conf, preds, labs)

    # Trivial epilogue: combine per-core / per-lane partials BEFORE abs, then
    # |sum(conf - acc)| / N summed over bins (pad rows are exactly 0).
    per_bin = jnp.sum(partials, axis=(0, 2))                 # (nb_pad,)
    ece = jnp.sum(jnp.abs(per_bin)) * (1.0 / float(n))
    return ece.reshape(1)


def ece_reference(confidences, predictions, labels, n_bins=N_BINS_DEFAULT):
    bounds = _bin_boundaries(n_bins)
    conf = confidences.astype(jnp.float32)
    acc = (predictions == labels).astype(jnp.float32)
    n = conf.shape[0]
    ece = jnp.zeros((1,), dtype=jnp.float32)
    for lo, hi in zip(bounds[:-1], bounds[1:]):
        in_bin = jnp.logical_and(conf > lo, conf <= hi)
        cnt = jnp.sum(in_bin.astype(jnp.float32))
        prop = cnt / n
        denom = jnp.maximum(cnt, 1.0)
        avg_acc = jnp.sum(jnp.where(in_bin, acc, 0.0)) / denom
        avg_conf = jnp.sum(jnp.where(in_bin, conf, 0.0)) / denom
        ece = ece + jnp.where(cnt > 0.0, jnp.abs(avg_conf - avg_acc) * prop, 0.0)
    return ece


if __name__ == "__main__":
    NUM_CLASSES = 10
    key = jax.random.PRNGKey(0)

    # Case 1: lane-aligned N -> zero-copy (no pad) path.
    N = 6400
    kc, kp, kl = jax.random.split(key, 3)
    confidences = jax.random.uniform(kc, (N,), dtype=jnp.float32)
    predictions = jax.random.randint(kp, (N,), 0, NUM_CLASSES, dtype=jnp.int32)
    labels = jax.random.randint(kl, (N,), 0, NUM_CLASSES, dtype=jnp.int32)

    out = jax.block_until_ready(ece_pallas(confidences, predictions, labels))
    ref = ece_reference(confidences, predictions, labels)
    assert out.shape == (1,)
    assert jnp.allclose(out, ref, atol=1e-5, rtol=1e-4), (out, ref)

    # Case 2: ragged N -> exercises the in-kernel validity mask.
    N2 = 1000
    out2 = jax.block_until_ready(
        ece_pallas(confidences[:N2], predictions[:N2], labels[:N2]))
    ref2 = ece_reference(confidences[:N2], predictions[:N2], labels[:N2])
    assert jnp.allclose(out2, ref2, atol=1e-5, rtol=1e-4), (out2, ref2)

    print("KERNEL_OK")
</pallas_src>

<mosaic_0001>
module attributes {stable_mosaic.version = 11 : i64} {
  func.func @_ece_kernel(%arg0: i32, %arg1: i32, %arg2: memref<50x128xf32, #tpu.memory_space<vmem>>, %arg3: memref<50x128xi32, #tpu.memory_space<vmem>>, %arg4: memref<50x128xi32, #tpu.memory_space<vmem>>, %arg5: memref<1x16x128xf32, #tpu.memory_space<vmem>>) attributes {dimension_semantics = [#tpu.dimension_semantics<parallel>, #tpu.dimension_semantics<arbitrary>], iteration_bounds = array<i64: 2, 1>, scalar_prefetch = 0 : i64, scratch_operands = 0 : i64, tpu.core_type = #tpu.core_type<tc>, window_params = [{transform_indices = @transform_0, window_bounds = array<i64: 50, 128>}, {transform_indices = @transform_1, window_bounds = array<i64: 50, 128>}, {transform_indices = @transform_2, window_bounds = array<i64: 50, 128>}, {transform_indices = @transform_3, window_bounds = array<i64: 1, 16, 128>}]} {
    %c0_i32 = arith.constant 0 : i32
    %0 = arith.cmpi eq, %arg1, %c0_i32 : i32
    %1 = arith.extui %0 : i1 to i32
    %c0_i32_0 = arith.constant 0 : i32
    %2 = arith.cmpi ne, %1, %c0_i32_0 : i32
    scf.if %2 {
      %cst_75 = arith.constant 0.000000e+00 : f32
      %154 = vector.broadcast %cst_75 : f32 to vector<16x128xf32>
      %c0_76 = arith.constant 0 : index
      %c0_77 = arith.constant 0 : index
      %c0_78 = arith.constant 0 : index
      %155 = vector.load %arg5[%c0_76, %c0_77, %c0_78] : memref<1x16x128xf32, #tpu.memory_space<vmem>>, vector<1x16x128xf32>
      %156 = vector.shape_cast %155 : vector<1x16x128xf32> to vector<16x128xf32>
      %157 = vector.shape_cast %154 : vector<16x128xf32> to vector<1x16x128xf32>
      tpu.vector_store %arg5[%c0_76, %c0_77, %c0_78], %157 {strides = array<i32>} : memref<1x16x128xf32, #tpu.memory_space<vmem>>, vector<1x16x128xf32>,
    } else {
    }
    %c0 = arith.constant 0 : index
    %c0_1 = arith.constant 0 : index
    %3 = vector.load %arg2[%c0, %c0_1] : memref<50x128xf32, #tpu.memory_space<vmem>>, vector<50x128xf32>
    %c0_2 = arith.constant 0 : index
    %c0_3 = arith.constant 0 : index
    %4 = vector.load %arg3[%c0_2, %c0_3] : memref<50x128xi32, #tpu.memory_space<vmem>>, vector<50x128xi32>
    %c0_4 = arith.constant 0 : index
    %c0_5 = arith.constant 0 : index
    %5 = vector.load %arg4[%c0_4, %c0_5] : memref<50x128xi32, #tpu.memory_space<vmem>>, vector<50x128xi32>
    %6 = arith.cmpi eq, %4, %5 : vector<50x128xi32>
    %7 = arith.extui %6 : vector<50x128xi1> to vector<50x128xi32>
    %8 = arith.sitofp %7 : vector<50x128xi32> to vector<50x128xf32>
    %c1_i32 = arith.constant 1 : i32
    %9 = arith.muli %arg0, %c1_i32 : i32
    %10 = arith.addi %9, %arg1 : i32
    %c6400_i32 = arith.constant 6400 : i32
    %11 = arith.muli %10, %c6400_i32 : i32
    %12 = tpu.iota {dimensions = array<i32: 0>} : vector<50x128xi32>
    %13 = tpu.iota {dimensions = array<i32: 1>} : vector<50x128xi32>
    %c128_i32 = arith.constant 128 : i32
    %14 = vector.broadcast %c128_i32 : i32 to vector<50x128xi32>
    %15 = arith.muli %12, %14 : vector<50x128xi32>
    %16 = vector.broadcast %11 : i32 to vector<50x128xi32>
    %17 = arith.addi %16, %15 : vector<50x128xi32>
    %18 = arith.addi %17, %13 : vector<50x128xi32>
    %c6400_i32_6 = arith.constant 6400 : i32
    %19 = vector.broadcast %c6400_i32_6 : i32 to vector<50x128xi32>
    %20 = arith.cmpi slt, %18, %19 : vector<50x128xi32>
    %cst = arith.constant -1.000000e+00 : f32
    %21 = vector.broadcast %cst : f32 to vector<50x128xf32>
    %22 = arith.select %20, %3, %21 : vector<50x128xi1>, vector<50x128xf32>
    %23 = arith.subf %22, %8 : vector<50x128xf32>
    %cst_7 = arith.constant 0.000000e+00 : f32
    %24 = vector.broadcast %cst_7 : f32 to vector<50x128xf32>
    %25 = arith.cmpf ogt, %22, %24 : vector<50x128xf32>
    %cst_8 = arith.constant 0.0666666701 : f32
    %26 = vector.broadcast %cst_8 : f32 to vector<50x128xf32>
    %27 = arith.cmpf ogt, %22, %26 : vector<50x128xf32>
    %cst_9 = arith.constant 0.13333334 : f32
    %28 = vector.broadcast %cst_9 : f32 to vector<50x128xf32>
    %29 = arith.cmpf ogt, %22, %28 : vector<50x128xf32>
    %cst_10 = arith.constant 2.000000e-01 : f32
    %30 = vector.broadcast %cst_10 : f32 to vector<50x128xf32>
    %31 = arith.cmpf ogt, %22, %30 : vector<50x128xf32>
    %cst_11 = arith.constant 0.266666681 : f32
    %32 = vector.broadcast %cst_11 : f32 to vector<50x128xf32>
    %33 = arith.cmpf ogt, %22, %32 : vector<50x128xf32>
    %cst_12 = arith.constant 0.333333343 : f32
    %34 = vector.broadcast %cst_12 : f32 to vector<50x128xf32>
    %35 = arith.cmpf ogt, %22, %34 : vector<50x128xf32>
    %cst_13 = arith.constant 4.000000e-01 : f32
    %36 = vector.broadcast %cst_13 : f32 to vector<50x128xf32>
    %37 = arith.cmpf ogt, %22, %36 : vector<50x128xf32>
    %cst_14 = arith.constant 0.466666669 : f32
    %38 = vector.broadcast %cst_14 : f32 to vector<50x128xf32>
    %39 = arith.cmpf ogt, %22, %38 : vector<50x128xf32>
    %cst_15 = arith.constant 0.533333361 : f32
    %40 = vector.broadcast %cst_15 : f32 to vector<50x128xf32>
    %41 = arith.cmpf ogt, %22, %40 : vector<50x128xf32>
    %cst_16 = arith.constant 6.000000e-01 : f32
    %42 = vector.broadcast %cst_16 : f32 to vector<50x128xf32>
    %43 = arith.cmpf ogt, %22, %42 : vector<50x128xf32>
    %cst_17 = arith.constant 0.666666686 : f32
    %44 = vector.broadcast %cst_17 : f32 to vector<50x128xf32>
    %45 = arith.cmpf ogt, %22, %44 : vector<50x128xf32>
    %cst_18 = arith.constant 0.733333349 : f32
    %46 = vector.broadcast %cst_18 : f32 to vector<50x128xf32>
    %47 = arith.cmpf ogt, %22, %46 : vector<50x128xf32>
    %cst_19 = arith.constant 8.000000e-01 : f32
    %48 = vector.broadcast %cst_19 : f32 to vector<50x128xf32>
    %49 = arith.cmpf ogt, %22, %48 : vector<50x128xf32>
    %cst_20 = arith.constant 0.866666674 : f32
    %50 = vector.broadcast %cst_20 : f32 to vector<50x128xf32>
    %51 = arith.cmpf ogt, %22, %50 : vector<50x128xf32>
    %cst_21 = arith.constant 0.933333337 : f32
    %52 = vector.broadcast %cst_21 : f32 to vector<50x128xf32>
    %53 = arith.cmpf ogt, %22, %52 : vector<50x128xf32>
    %cst_22 = arith.constant 1.000000e+00 : f32
    %54 = vector.broadcast %cst_22 : f32 to vector<50x128xf32>
    %55 = arith.cmpf ogt, %22, %54 : vector<50x128xf32>
    %cst_23 = arith.constant dense<true> : vector<50x128xi1>
    %56 = arith.xori %27, %cst_23 : vector<50x128xi1>
    %57 = arith.andi %25, %56 : vector<50x128xi1>
    %cst_24 = arith.constant 0.000000e+00 : f32
    %58 = vector.broadcast %cst_24 : f32 to vector<50x128xf32>
    %59 = arith.select %57, %23, %58 : vector<50x128xi1>, vector<50x128xf32>
    %cst_25 = arith.constant dense<0.000000e+00> : vector<128xf32>
    %60 = vector.multi_reduction <add>, %59, %cst_25 [0] : vector<50x128xf32> to vector<128xf32>
    %61 = vector.shape_cast %60 : vector<128xf32> to vector<1x128xf32>
    %cst_26 = arith.constant dense<true> : vector<50x128xi1>
    %62 = arith.xori %29, %cst_26 : vector<50x128xi1>
    %63 = arith.andi %27, %62 : vector<50x128xi1>
    %cst_27 = arith.constant 0.000000e+00 : f32
    %64 = vector.broadcast %cst_27 : f32 to vector<50x128xf32>
    %65 = arith.select %63, %23, %64 : vector<50x128xi1>, vector<50x128xf32>
    %cst_28 = arith.constant dense<0.000000e+00> : vector<128xf32>
    %66 = vector.multi_reduction <add>, %65, %cst_28 [0] : vector<50x128xf32> to vector<128xf32>
    %67 = vector.shape_cast %66 : vector<128xf32> to vector<1x128xf32>
    %cst_29 = arith.constant dense<true> : vector<50x128xi1>
    %68 = arith.xori %31, %cst_29 : vector<50x128xi1>
    %69 = arith.andi %29, %68 : vector<50x128xi1>
    %cst_30 = arith.constant 0.000000e+00 : f32
    %70 = vector.broadcast %cst_30 : f32 to vector<50x128xf32>
    %71 = arith.select %69, %23, %70 : vector<50x128xi1>, vector<50x128xf32>
    %cst_31 = arith.constant dense<0.000000e+00> : vector<128xf32>
    %72 = vector.multi_reduction <add>, %71, %cst_31 [0] : vector<50x128xf32> to vector<128xf32>
    %73 = vector.shape_cast %72 : vector<128xf32> to vector<1x128xf32>
    %cst_32 = arith.constant dense<true> : vector<50x128xi1>
    %74 = arith.xori %33, %cst_32 : vector<50x128xi1>
    %75 = arith.andi %31, %74 : vector<50x128xi1>
    %cst_33 = arith.constant 0.000000e+00 : f32
    %76 = vector.broadcast %cst_33 : f32 to vector<50x128xf32>
    %77 = arith.select %75, %23, %76 : vector<50x128xi1>, vector<50x128xf32>
    %cst_34 = arith.constant dense<0.000000e+00> : vector<128xf32>
    %78 = vector.multi_reduction <add>, %77, %cst_34 [0] : vector<50x128xf32> to vector<128xf32>
    %79 = vector.shape_cast %78 : vector<128xf32> to vector<1x128xf32>
    %cst_35 = arith.constant dense<true> : vector<50x128xi1>
    %80 = arith.xori %35, %cst_35 : vector<50x128xi1>
    %81 = arith.andi %33, %80 : vector<50x128xi1>
    %cst_36 = arith.constant 0.000000e+00 : f32
    %82 = vector.broadcast %cst_36 : f32 to vector<50x128xf32>
    %83 = arith.select %81, %23, %82 : vector<50x128xi1>, vector<50x128xf32>
    %cst_37 = arith.constant dense<0.000000e+00> : vector<128xf32>
    %84 = vector.multi_reduction <add>, %83, %cst_37 [0] : vector<50x128xf32> to vector<128xf32>
    %85 = vector.shape_cast %84 : vector<128xf32> to vector<1x128xf32>
    %cst_38 = arith.constant dense<true> : vector<50x128xi1>
    %86 = arith.xori %37, %cst_38 : vector<50x128xi1>
    %87 = arith.andi %35, %86 : vector<50x128xi1>
    %cst_39 = arith.constant 0.000000e+00 : f32
    %88 = vector.broadcast %cst_39 : f32 to vector<50x128xf32>
    %89 = arith.select %87, %23, %88 : vector<50x128xi1>, vector<50x128xf32>
    %cst_40 = arith.constant dense<0.000000e+00> : vector<128xf32>
    %90 = vector.multi_reduction <add>, %89, %cst_40 [0] : vector<50x128xf32> to vector<128xf32>
    %91 = vector.shape_cast %90 : vector<128xf32> to vector<1x128xf32>
    %cst_41 = arith.constant dense<true> : vector<50x128xi1>
    %92 = arith.xori %39, %cst_41 : vector<50x128xi1>
    %93 = arith.andi %37, %92 : vector<50x128xi1>
    %cst_42 = arith.constant 0.000000e+00 : f32
    %94 = vector.broadcast %cst_42 : f32 to vector<50x128xf32>
    %95 = arith.select %93, %23, %94 : vector<50x128xi1>, vector<50x128xf32>
    %cst_43 = arith.constant dense<0.000000e+00> : vector<128xf32>
    %96 = vector.multi_reduction <add>, %95, %cst_43 [0] : vector<50x128xf32> to vector<128xf32>
    %97 = vector.shape_cast %96 : vector<128xf32> to vector<1x128xf32>
    %cst_44 = arith.constant dense<true> : vector<50x128xi1>
    %98 = arith.xori %41, %cst_44 : vector<50x128xi1>
    %99 = arith.andi %39, %98 : vector<50x128xi1>
    %cst_45 = arith.constant 0.000000e+00 : f32
    %100 = vector.broadcast %cst_45 : f32 to vector<50x128xf32>
    %101 = arith.select %99, %23, %100 : vector<50x128xi1>, vector<50x128xf32>
    %cst_46 = arith.constant dense<0.000000e+00> : vector<128xf32>
    %102 = vector.multi_reduction <add>, %101, %cst_46 [0] : vector<50x128xf32> to vector<128xf32>
    %103 = vector.shape_cast %102 : vector<128xf32> to vector<1x128xf32>
    %cst_47 = arith.constant dense<true> : vector<50x128xi1>
    %104 = arith.xori %43, %cst_47 : vector<50x128xi1>
    %105 = arith.andi %41, %104 : vector<50x128xi1>
    %cst_48 = arith.constant 0.000000e+00 : f32
    %106 = vector.broadcast %cst_48 : f32 to vector<50x128xf32>
    %107 = arith.select %105, %23, %106 : vector<50x128xi1>, vector<50x128xf32>
    %cst_49 = arith.constant dense<0.000000e+00> : vector<128xf32>
    %108 = vector.multi_reduction <add>, %107, %cst_49 [0] : vector<50x128xf32> to vector<128xf32>
    %109 = vector.shape_cast %108 : vector<128xf32> to vector<1x128xf32>
    %cst_50 = arith.constant dense<true> : vector<50x128xi1>
    %110 = arith.xori %45, %cst_50 : vector<50x128xi1>
    %111 = arith.andi %43, %110 : vector<50x128xi1>
    %cst_51 = arith.constant 0.000000e+00 : f32
    %112 = vector.broadcast %cst_51 : f32 to vector<50x128xf32>
    %113 = arith.select %111, %23, %112 : vector<50x128xi1>, vector<50x128xf32>
    %cst_52 = arith.constant dense<0.000000e+00> : vector<128xf32>
    %114 = vector.multi_reduction <add>, %113, %cst_52 [0] : vector<50x128xf32> to vector<128xf32>
    %115 = vector.shape_cast %114 : vector<128xf32> to vector<1x128xf32>
    %cst_53 = arith.constant dense<true> : vector<50x128xi1>
    %116 = arith.xori %47, %cst_53 : vector<50x128xi1>
    %117 = arith.andi %45, %116 : vector<50x128xi1>
    %cst_54 = arith.constant 0.000000e+00 : f32
    %118 = vector.broadcast %cst_54 : f32 to vector<50x128xf32>
    %119 = arith.select %117, %23, %118 : vector<50x128xi1>, vector<50x128xf32>
    %cst_55 = arith.constant dense<0.000000e+00> : vector<128xf32>
    %120 = vector.multi_reduction <add>, %119, %cst_55 [0] : vector<50x128xf32> to vector<128xf32>
    %121 = vector.shape_cast %120 : vector<128xf32> to vector<1x128xf32>
    %cst_56 = arith.constant dense<true> : vector<50x128xi1>
    %122 = arith.xori %49, %cst_56 : vector<50x128xi1>
    %123 = arith.andi %47, %122 : vector<50x128xi1>
    %cst_57 = arith.constant 0.000000e+00 : f32
    %124 = vector.broadcast %cst_57 : f32 to vector<50x128xf32>
    %125 = arith.select %123, %23, %124 : vector<50x128xi1>, vector<50x128xf32>
    %cst_58 = arith.constant dense<0.000000e+00> : vector<128xf32>
    %126 = vector.multi_reduction <add>, %125, %cst_58 [0] : vector<50x128xf32> to vector<128xf32>
    %127 = vector.shape_cast %126 : vector<128xf32> to vector<1x128xf32>
    %cst_59 = arith.constant dense<true> : vector<50x128xi1>
    %128 = arith.xori %51, %cst_59 : vector<50x128xi1>
    %129 = arith.andi %49, %128 : vector<50x128xi1>
    %cst_60 = arith.constant 0.000000e+00 : f32
    %130 = vector.broadcast %cst_60 : f32 to vector<50x128xf32>
    %131 = arith.select %129, %23, %130 : vector<50x128xi1>, vector<50x128xf32>
    %cst_61 = arith.constant dense<0.000000e+00> : vector<128xf32>
    %132 = vector.multi_reduction <add>, %131, %cst_61 [0] : vector<50x128xf32> to vector<128xf32>
    %133 = vector.shape_cast %132 : vector<128xf32> to vector<1x128xf32>
    %cst_62 = arith.constant dense<true> : vector<50x128xi1>
    %134 = arith.xori %53, %cst_62 : vector<50x128xi1>
    %135 = arith.andi %51, %134 : vector<50x128xi1>
    %cst_63 = arith.constant 0.000000e+00 : f32
    %136 = vector.broadcast %cst_63 : f32 to vector<50x128xf32>
    %137 = arith.select %135, %23, %136 : vector<50x128xi1>, vector<50x128xf32>
    %cst_64 = arith.constant dense<0.000000e+00> : vector<128xf32>
    %138 = vector.multi_reduction <add>, %137, %cst_64 [0] : vector<50x128xf32> to vector<128xf32>
    %139 = vector.shape_cast %138 : vector<128xf32> to vector<1x128xf32>
    %cst_65 = arith.constant dense<true> : vector<50x128xi1>
    %140 = arith.xori %55, %cst_65 : vector<50x128xi1>
    %141 = arith.andi %53, %140 : vector<50x128xi1>
    %cst_66 = arith.constant 0.000000e+00 : f32
    %142 = vector.broadcast %cst_66 : f32 to vector<50x128xf32>
    %143 = arith.select %141, %23, %142 : vector<50x128xi1>, vector<50x128xf32>
    %cst_67 = arith.constant dense<0.000000e+00> : vector<128xf32>
    %144 = vector.multi_reduction <add>, %143, %cst_67 [0] : vector<50x128xf32> to vector<128xf32>
    %145 = vector.shape_cast %144 : vector<128xf32> to vector<1x128xf32>
    %cst_68 = arith.constant 0.000000e+00 : f32
    %146 = vector.broadcast %cst_68 : f32 to vector<1x128xf32>
    %c0_69 = arith.constant 0 : index
    %c0_70 = arith.constant 0 : index
    %c0_71 = arith.constant 0 : index
    %147 = vector.load %arg5[%c0_69, %c0_70, %c0_71] : memref<1x16x128xf32, #tpu.memory_space<vmem>>, vector<1x16x128xf32>
    %148 = vector.shape_cast %147 : vector<1x16x128xf32> to vector<16x128xf32>
    %149 = tpu.concatenate %61, %67, %73, %79, %85, %91, %97, %103, %109, %115, %121, %127, %133, %139, %145, %146 in 0 : vector<1x128xf32>, vector<1x128xf32>, vector<1x128xf32>, vector<1x128xf32>, vector<1x128xf32>, vector<1x128xf32>, vector<1x128xf32>, vector<1x128xf32>, vector<1x128xf32>, vector<1x128xf32>, vector<1x128xf32>, vector<1x128xf32>, vector<1x128xf32>, vector<1x128xf32>, vector<1x128xf32>, vector<1x128xf32> -> vector<16x128xf32>
    %150 = arith.addf %148, %149 : vector<16x128xf32>
    %c0_72 = arith.constant 0 : index
    %c0_73 = arith.constant 0 : index
    %c0_74 = arith.constant 0 : index
    %151 = vector.load %arg5[%c0_72, %c0_73, %c0_74] : memref<1x16x128xf32, #tpu.memory_space<vmem>>, vector<1x16x128xf32>
    %152 = vector.shape_cast %151 : vector<1x16x128xf32> to vector<16x128xf32>
    %153 = vector.shape_cast %150 : vector<16x128xf32> to vector<1x16x128xf32>
    tpu.vector_store %arg5[%c0_72, %c0_73, %c0_74], %153 {strides = array<i32>} : memref<1x16x128xf32, #tpu.memory_space<vmem>>, vector<1x16x128xf32>,
    return
  }
  func.func @transform_0(%arg0: i32, %arg1: i32) -> (i32, i32) {
    %c1_i32 = arith.constant 1 : i32
    %0 = arith.muli %arg0, %c1_i32 : i32
    %1 = arith.addi %0, %arg1 : i32
    %c0_i32 = arith.constant 0 : i32
    %2 = arith.minsi %1, %c0_i32 : i32
    %c0_i32_0 = arith.constant 0 : i32
    %c0_i32_1 = arith.constant 0 : i32
    return %2, %c0_i32_0 : i32, i32
  }
  func.func @transform_1(%arg0: i32, %arg1: i32) -> (i32, i32) {
    %c1_i32 = arith.constant 1 : i32
    %0 = arith.muli %arg0, %c1_i32 : i32
    %1 = arith.addi %0, %arg1 : i32
    %c0_i32 = arith.constant 0 : i32
    %2 = arith.minsi %1, %c0_i32 : i32
    %c0_i32_0 = arith.constant 0 : i32
    %c0_i32_1 = arith.constant 0 : i32
    return %2, %c0_i32_0 : i32, i32
  }
  func.func @transform_2(%arg0: i32, %arg1: i32) -> (i32, i32) {
    %c1_i32 = arith.constant 1 : i32
    %0 = arith.muli %arg0, %c1_i32 : i32
    %1 = arith.addi %0, %arg1 : i32
    %c0_i32 = arith.constant 0 : i32
    %2 = arith.minsi %1, %c0_i32 : i32
    %c0_i32_0 = arith.constant 0 : i32
    %c0_i32_1 = arith.constant 0 : i32
    return %2, %c0_i32_0 : i32, i32
  }
  func.func @transform_3(%arg0: i32, %arg1: i32) -> (i32, i32, i32) {
    %c0_i32 = arith.constant 0 : i32
    %c0_i32_0 = arith.constant 0 : i32
    %c0_i32_1 = arith.constant 0 : i32
    return %arg0, %c0_i32, %c0_i32_0 : i32, i32, i32
  }
}

</mosaic_0001>

<llo_original>
// kernel: tpu_custom_call.1
$region0: #{tpu_custom_call.1}
  #allocation0 [shape = 'u32[]', space=smem, size = 0x4, offset = 0x4, fixed_abs, tag = 'smem constant byte address 0x4 - core index']
  #allocation1 [shape = 'u32[144,128]{1,0:T(1,128)}', space=vmem, size = 0x12000, scoped, tag = 'internal scratch']
  %s0 = inlined_call_operand.hbm [shape: f32[50,128], index: 0, kind: input, shape index: {}]
  %s1 = inlined_call_operand.hbm [shape: s32[50,128], index: 1, kind: input, shape index: {}]
  %s2 = inlined_call_operand.hbm [shape: s32[50,128], index: 2, kind: input, shape index: {}]
  %s3 = inlined_call_operand.hbm [shape: f32[2,16,128], index: 3, kind: output, shape index: {}]
  %s4 = sld [smem:[#allocation0]]
  $region61: #{tpu_custom_call.1} parent=0
    _
  %s6 = ssub.s32 1, %s4
  %s7 = scalar_select 0, %s6, %s4
  $region1: #{tpu_custom_call.1} parent=0
    #allocation2 [shape = 'u8[57344]{0}', space=vmem, size = 0xe000, scoped, tag = 'input window, operand 0']
    #allocation3 [shape = 's32[2]{0}', space=sflag, size = 0x8, scoped, tag = 'scoped memory for tpu_custom_call.1']
    #allocation4 [shape = 's32[2]{0}', space=sflag, size = 0x8, scoped, tag = 'scoped memory for tpu_custom_call.1']
    #allocation5 [shape = 'u8[57344]{0}', space=vmem, size = 0xe000, scoped, tag = 'input window, operand 1']
    #allocation6 [shape = 's32[2]{0}', space=sflag, size = 0x8, scoped, tag = 'scoped memory for tpu_custom_call.1']
    #allocation7 [shape = 'u8[57344]{0}', space=vmem, size = 0xe000, scoped, tag = 'input window, operand 2']
    #allocation8 [shape = 'u8[16384]{0}', space=vmem, size = 0x4000, scoped, tag = 'output window, operand 0']
    %8 = vsyncpa [#allocation3], 0
    %s9 = scalar_lea.sflag [#allocation3], 1
    %10 = vsyncpa %s9, 0
    %11 = vsyncpa [#allocation6], 0
    %s12 = scalar_lea.sflag [#allocation6], 1
    %13 = vsyncpa %s12, 0
    %14 = vsyncpa [#allocation4], 0
    %s15 = scalar_lea.sflag [#allocation4], 1
    %16 = vsyncpa %s15, 0
    loop: start=0, step=1, limit=4
    $region2: #{tpu_custom_call.1} parent=1 // loop_pre_header
      _
    $region3: #{tpu_custom_call.1} parent=1 // loop_header
      %s18 = sphi 0, %s22
      %p19 = scmp.ge.s32.totalorder %s18, 4
      %s25 = sphi 0, %s37
      %s26 = sphi 0, %s33
      %s27 = sphi 0, %s25
      %s28 = sphi 0, %s26
      %s29 = sphi 0, %s27
      %s30 = sphi 0, %s28
      %s46 = sphi 0, %s48
      %s49 = sphi 0, %s46
      %s50 = sphi 0, %s49
      %s66 = sphi 0, %s50
      %s78 = sphi 0, %s80
      %s81 = sphi 0, %s78
      %s82 = sphi 0, %s81
      %s98 = sphi 0, %s82
      %s110 = sphi 0, %s112
      %s113 = sphi 0, %s110
      %s114 = sphi 0, %s113
      %s130 = sphi 0, %s114
      %s136 = sphi 0, %s138
      %s139 = sphi 0, %s136
      %s140 = sphi 0, %s139
      %s156 = sphi 0, %s140
    $region4: #{tpu_custom_call.1} parent=1 // loop_header_branch
      %21 = sbr.rel (%p19) target = $region8
    $region5: #{tpu_custom_call.1} parent=1 // loop_body
      %s23 = ssub.s32 %s18, 1
      %s24 = ssub.s32 %s18, 2
      %s31 = sadd.s32 1, %s26
      %p32 = scmp.ge.s32.totalorder %s31, 1
      %s33 = scalar_select %p32, 0, %s31
      %s34 = sadd.s32 1, %s25
      %s35 = scalar_select %p32, %s34, %s25
      %p36 = scmp.ge.s32.totalorder %s35, 2
      %s37 = scalar_select %p36, 0, %s35
      %s38 = sadd.s32 %s25, %s26
      %p39 = scmp.lt.s32.totalorder %s38, 0
      %s40 = scalar_select %p39, %s38, 0
      %s41 = sadd.s32 %s37, %s33
      %p42 = scmp.lt.s32.totalorder %s41, 0
      %s43 = scalar_select %p42, %s41, 0
      %s44 = ssub.s32 %s40, %s43
      %p45 = scmp.eq.s32.totalorder %s44, 0
      %s47 = sadd.s32 %s46, 1
      %s48 = scalar_select %p45, %s46, %s47
      %p51 = pneg %p45
      %p52 = scmp.eq.s32.totalorder %s18, 1
      %p53 = por %p51, %p52
      %p54 = scmp.ne.s32.totalorder %s46, %s49
      %p55 = scmp.eq.s32.totalorder %s18, 0
      %p56 = por %p54, %p55
      %p57 = scmp.ne.s32.totalorder %s46, %s49
      %p58 = scmp.eq.s32.totalorder %s23, 1
      %p59 = por %p57, %p58
      %p60 = scmp.ne.s32.totalorder %s49, %s50
      %p61 = scmp.eq.s32.totalorder %s23, 0
      %p62 = por %p60, %p61
      %p63 = scmp.ne.s32.totalorder %s49, %s50
      %p64 = scmp.eq.s32.totalorder %s24, 1
      %p65 = por %p63, %p64
      %p67 = scmp.ne.s32.totalorder %s50, %s66
      %p68 = scmp.eq.s32.totalorder %s24, 0
      %p69 = por %p67, %p68
      %s70 = sadd.s32 %s25, %s26
      %p71 = scmp.lt.s32.totalorder %s70, 0
      %s72 = scalar_select %p71, %s70, 0
      %s73 = sadd.s32 %s37, %s33
      %p74 = scmp.lt.s32.totalorder %s73, 0
      %s75 = scalar_select %p74, %s73, 0
      %s76 = ssub.s32 %s72, %s75
      %p77 = scmp.eq.s32.totalorder %s76, 0
      %s79 = sadd.s32 %s78, 1
      %s80 = scalar_select %p77, %s78, %s79
      %p83 = pneg %p77
      %p84 = scmp.eq.s32.totalorder %s18, 1
      %p85 = por %p83, %p84
      %p86 = scmp.ne.s32.totalorder %s78, %s81
      %p87 = scmp.eq.s32.totalorder %s18, 0
      %p88 = por %p86, %p87
      %p89 = scmp.ne.s32.totalorder %s78, %s81
      %p90 = scmp.eq.s32.totalorder %s23, 1
      %p91 = por %p89, %p90
      %p92 = scmp.ne.s32.totalorder %s81, %s82
      %p93 = scmp.eq.s32.totalorder %s23, 0
      %p94 = por %p92, %p93
      %p95 = scmp.ne.s32.totalorder %s81, %s82
      %p96 = scmp.eq.s32.totalorder %s24, 1
      %p97 = por %p95, %p96
      %p99 = scmp.ne.s32.totalorder %s82, %s98
      %p100 = scmp.eq.s32.totalorder %s24, 0
      %p101 = por %p99, %p100
      %s102 = sadd.s32 %s25, %s26
      %p103 = scmp.lt.s32.totalorder %s102, 0
      %s104 = scalar_select %p103, %s102, 0
      %s105 = sadd.s32 %s37, %s33
      %p106 = scmp.lt.s32.totalorder %s105, 0
      %s107 = scalar_select %p106, %s105, 0
      %s108 = ssub.s32 %s104, %s107
      %p109 = scmp.eq.s32.totalorder %s108, 0
      %s111 = sadd.s32 %s110, 1
      %s112 = scalar_select %p109, %s110, %s111
      %p115 = pneg %p109
      %p116 = scmp.eq.s32.totalorder %s18, 1
      %p117 = por %p115, %p116
      %p118 = scmp.ne.s32.totalorder %s110, %s113
      %p119 = scmp.eq.s32.totalorder %s18, 0
      %p120 = por %p118, %p119
      %p121 = scmp.ne.s32.totalorder %s110, %s113
      %p122 = scmp.eq.s32.totalorder %s23, 1
      %p123 = por %p121, %p122
      %p124 = scmp.ne.s32.totalorder %s113, %s114
      %p125 = scmp.eq.s32.totalorder %s23, 0
      %p126 = por %p124, %p125
      %p127 = scmp.ne.s32.totalorder %s113, %s114
      %p128 = scmp.eq.s32.totalorder %s24, 1
      %p129 = por %p127, %p128
      %p131 = scmp.ne.s32.totalorder %s114, %s130
      %p132 = scmp.eq.s32.totalorder %s24, 0
      %p133 = por %p131, %p132
      %s134 = ssub.s32 %s25, %s37
      %p135 = scmp.eq.s32.totalorder %s134, 0
      %s137 = sadd.s32 %s136, 1
      %s138 = scalar_select %p135, %s136, %s137
      %p141 = pneg %p135
      %p142 = scmp.eq.s32.totalorder %s18, 1
      %p143 = por %p141, %p142
      %p144 = scmp.ne.s32.totalorder %s136, %s139
      %p145 = scmp.eq.s32.totalorder %s18, 0
      %p146 = por %p144, %p145
      %p147 = scmp.ne.s32.totalorder %s136, %s139
      %p148 = scmp.eq.s32.totalorder %s23, 1
      %p149 = por %p147, %p148
      %p150 = scmp.ne.s32.totalorder %s139, %s140
      %p151 = scmp.eq.s32.totalorder %s23, 0
      %p152 = por %p150, %p151
      %p153 = scmp.ne.s32.totalorder %s139, %s140
      %p154 = scmp.eq.s32.totalorder %s24, 1
      %p155 = por %p153, %p154
      %p157 = scmp.ne.s32.totalorder %s140, %s156
      %p158 = scmp.eq.s32.totalorder %s24, 0
      %p159 = por %p157, %p158
      %p160 = scmp.le.s32.totalorder 1, %s18
      %p161 = scmp.lt.s32.totalorder %s18, 3
      %p162 = pnand %p160, %p161
      %p163 = pneg %p162
      // Predicated region
      $region9: #{tpu_custom_call.1} parent=5 // pred_check
        _
      $region10: #{tpu_custom_call.1} parent=5 // pred_check_branch
        %165 = sbr.rel (%p162) target = $region12
      $region11: #{tpu_custom_call.1} parent=5 // pred_region
        %s166 = ssub.s32 %s18, 1
      $region12: #{tpu_custom_call.1} parent=5 // pred_fallthru
        _
      %p167 = scmp.lt.s32.totalorder %s18, 2
      // Predicated region
      $region13: #{tpu_custom_call.1} parent=5 // pred_check
        %p168 = pneg %p167
      $region14: #{tpu_custom_call.1} parent=5 // pred_check_branch
        %170 = sbr.rel (%p168) target = $region16
      $region15: #{tpu_custom_call.1} parent=5 // pred_region
        // Predicated region
        $region17: #{tpu_custom_call.1} parent=15 // pred_check
          %p171 = pneg %p56
        $region18: #{tpu_custom_call.1} parent=15 // pred_check_branch
          %173 = sbr.rel (%p171) target = $region20
        $region19: #{tpu_custom_call.1} parent=15 // pred_region
          %s174 = sand.u32 %s46, 1
          %s175 = scalar_lea.sflag [#allocation3], %s174
          %s176 = sand.u32 %s46, 1
          %s177 = smul.addr %s176, 56
          %s178 = scalar_lea.vmem [#allocation2], %s177
          %s179 = sadd.s32 %s25, %s26
          %p180 = scmp.lt.s32.totalorder %s179, 0
          %s181 = scalar_select %p180, %s179, 0
          %s182 = smul.u32 7, %s181
          %s184 = ssub.s32 896, 896
          %185 = vsyncadd %s175, %s184
          %s186 = smul.addr %s182, 128
          %s187 = scalar_lea.hbm %s0, %s186
          %s188 = sshll.u32 %s178, 4
          %s189 = int_to_ptr.vmem [resolvable:$true] %s188
          %194 = dma.hbm_to_vmem [thread:$0]  %s187, 896, %s189, %s175, 128, 128, 8
        $region20: #{tpu_custom_call.1} parent=15 // pred_fallthru
          _
        // Predicated region
        $region21: #{tpu_custom_call.1} parent=15 // pred_check
          %p195 = pneg %p88
        $region22: #{tpu_custom_call.1} parent=15 // pred_check_branch
          %197 = sbr.rel (%p195) target = $region24
        $region23: #{tpu_custom_call.1} parent=15 // pred_region
          %s198 = sand.u32 %s18, 1
          %s199 = scalar_lea.sflag [#allocation6], %s198
          %s200 = sand.u32 %s78, 1
          %s201 = smul.addr %s200, 56
          %s202 = scalar_lea.vmem [#allocation5], %s201
          %s203 = sadd.s32 %s25, %s26
          %p204 = scmp.lt.s32.totalorder %s203, 0
          %s205 = scalar_select %p204, %s203, 0
          %s206 = smul.u32 7, %s205
          %s208 = ssub.s32 896, 896
          %209 = vsyncadd %s199, %s208
          %s210 = smul.addr %s206, 128
          %s211 = scalar_lea.hbm %s1, %s210
          %s212 = sshll.u32 %s202, 4
          %s213 = int_to_ptr.vmem [resolvable:$true] %s212
          %218 = dma.hbm_to_vmem [thread:$0]  %s211, 896, %s213, %s199, 128, 128, 8
        $region24: #{tpu_custom_call.1} parent=15 // pred_fallthru
          _
        // Predicated region
        $region25: #{tpu_custom_call.1} parent=15 // pred_check
          %p219 = pneg %p120
        $region26: #{tpu_custom_call.1} parent=15 // pred_check_branch
          %221 = sbr.rel (%p219) target = $region28
        $region27: #{tpu_custom_call.1} parent=15 // pred_region
          %s222 = sand.u32 %s18, 1
          %s223 = scalar_lea.sflag [#allocation6], %s222
          %s224 = sand.u32 %s110, 1
          %s225 = smul.addr %s224, 56
          %s226 = scalar_lea.vmem [#allocation7], %s225
          %s227 = sadd.s32 %s25, %s26
          %p228 = scmp.lt.s32.totalorder %s227, 0
          %s229 = scalar_select %p228, %s227, 0
          %s230 = smul.u32 7, %s229
          %s232 = ssub.s32 896, 896
          %233 = vsyncadd %s223, %s232
          %s234 = smul.addr %s230, 128
          %s235 = scalar_lea.hbm %s2, %s234
          %s236 = sshll.u32 %s226, 4
          %s237 = int_to_ptr.vmem [resolvable:$true] %s236
          %242 = dma.hbm_to_vmem [thread:$0]  %s235, 896, %s237, %s223, 128, 128, 8
        $region28: #{tpu_custom_call.1} parent=15 // pred_fallthru
          _
      $region16: #{tpu_custom_call.1} parent=5 // pred_fallthru
        _
      %p243 = scmp.le.s32.totalorder 1, %s18
      %p244 = scmp.lt.s32.totalorder %s18, 3
      %p245 = pnand %p243, %p244
      %p246 = pneg %p245
      // Predicated region
      $region29: #{tpu_custom_call.1} parent=5 // pred_check
        _
      $region30: #{tpu_custom_call.1} parent=5 // pred_check_branch
        %248 = sbr.rel (%p245) target = $region32
      $region31: #{tpu_custom_call.1} parent=5 // pred_region
        %s249 = ssub.s32 %s18, 1
        %s250 = sand.u32 %s49, 1
        %s251 = scalar_lea.sflag [#allocation3], %s250
        %s252 = sand.u32 %s49, 1
        %s253 = smul.addr %s252, 56
        %s254 = scalar_lea.vmem [#allocation2], %s253
        // Predicated region
        $region33: #{tpu_custom_call.1} parent=31 // pred_check
          %p255 = pneg %p62
        $region34: #{tpu_custom_call.1} parent=31 // pred_check_branch
          %257 = sbr.rel (%p255) target = $region36
        $region35: #{tpu_custom_call.1} parent=31 // pred_region
          %258 = dma.done %s251, 896
        $region36: #{tpu_custom_call.1} parent=31 // pred_fallthru
          _
        %s259 = sand.u32 %s23, 1
        %s260 = scalar_lea.sflag [#allocation6], %s259
        %s261 = sand.u32 %s81, 1
        %s262 = smul.addr %s261, 56
        %s263 = scalar_lea.vmem [#allocation5], %s262
        // Predicated region
        $region37: #{tpu_custom_call.1} parent=31 // pred_check
          %p264 = pneg %p94
        $region38: #{tpu_custom_call.1} parent=31 // pred_check_branch
          %266 = sbr.rel (%p264) target = $region40
        $region39: #{tpu_custom_call.1} parent=31 // pred_region
          %267 = dma.done %s260, 896
        $region40: #{tpu_custom_call.1} parent=31 // pred_fallthru
          _
        %s268 = sand.u32 %s23, 1
        %s269 = scalar_lea.sflag [#allocation6], %s268
        %s270 = sand.u32 %s113, 1
        %s271 = smul.addr %s270, 56
        %s272 = scalar_lea.vmem [#allocation7], %s271
        // Predicated region
        $region41: #{tpu_custom_call.1} parent=31 // pred_check
          %p273 = pneg %p126
        $region42: #{tpu_custom_call.1} parent=31 // pred_check_branch
          %275 = sbr.rel (%p273) target = $region44
        $region43: #{tpu_custom_call.1} parent=31 // pred_region
          %276 = dma.done %s269, 896
        $region44: #{tpu_custom_call.1} parent=31 // pred_fallthru
          _
        %s277 = sand.u32 %s49, 1
        %s278 = scalar_lea.sflag [#allocation3], %s277
        %s279 = sand.u32 %s49, 1
        %s280 = smul.addr %s279, 56
        %s281 = scalar_lea.vmem [#allocation2], %s280
        %p282 = pneg %p62
        %p283 = pneg %p59
        %s284 = sand.u32 %s23, 1
        %s285 = scalar_lea.sflag [#allocation6], %s284
        %s286 = sand.u32 %s81, 1
        %s287 = smul.addr %s286, 56
        %s288 = scalar_lea.vmem [#allocation5], %s287
        %p289 = pneg %p94
        %p290 = pneg %p91
        %s291 = sand.u32 %s23, 1
        %s292 = scalar_lea.sflag [#allocation6], %s291
        %s293 = sand.u32 %s113, 1
        %s294 = smul.addr %s293, 56
        %s295 = scalar_lea.vmem [#allocation7], %s294
        %p296 = pneg %p126
        %p297 = pneg %p123
        %p298 = pneg %p152
        %p299 = pneg %p149
        %s300 = sand.u32 %s139, 1
        %s301 = scalar_lea.sflag [#allocation4], %s300
        %s302 = sand.u32 %s139, 1
        %s303 = smul.addr %s302, 16
        %s304 = scalar_lea.vmem [#allocation8], %s303
        %s305 = sadd.s32 %s27, %s28
        %p306 = scmp.lt.s32.totalorder %s305, 0
        %s307 = scalar_select %p306, %s305, 0
        %s308 = smul.u32 7, %s307
        %s309 = sadd.s32 %s27, %s28
        %p310 = scmp.lt.s32.totalorder %s309, 0
        %s311 = scalar_select %p310, %s309, 0
        %s312 = smul.u32 7, %s311
        %s313 = sadd.s32 %s27, %s28
        %p314 = scmp.lt.s32.totalorder %s313, 0
        %s315 = scalar_select %p314, %s313, 0
        %s316 = smul.u32 7, %s315
        %p317 = scmp.eq.s32.totalorder %s28, 0
        // Predicated region
        $region45: #{tpu_custom_call.1} parent=31 // pred_check
          %p318 = pneg %p317
        $region46: #{tpu_custom_call.1} parent=31 // pred_check_branch
          %320 = sbr.rel (%p318) target = $region48
        $region47: #{tpu_custom_call.1} parent=31 // pred_region
          %321 = vst [vmem:[%s304] sm:$0xff] 0.0
          %322 = vst [vmem:[%s304 + $0x8] sm:$0xff] 0.0
        $region48: #{tpu_custom_call.1} parent=31 // pred_fallthru
          _
        %v323 = vld [vmem:[%s254] sm:$0xff]
        %v324 = vld [vmem:[%s254 + $0x8] sm:$0xff]
        %v325 = vld [vmem:[%s254 + $0x10] sm:$0xff]
        %v326 = vld [vmem:[%s254 + $0x18] sm:$0xff]
        %v327 = vld [vmem:[%s254 + $0x20] sm:$0xff]
        %v328 = vld [vmem:[%s254 + $0x28] sm:$0xff]
        %v329 = vld [vmem:[%s254 + $0x30] sm:$0x3]
        %v330 = vld [vmem:[%s263] sm:$0xff]
        %v331 = vld [vmem:[%s263 + $0x8] sm:$0xff]
        %v332 = vld [vmem:[%s263 + $0x10] sm:$0xff]
        %v333 = vld [vmem:[%s263 + $0x18] sm:$0xff]
        %v334 = vld [vmem:[%s263 + $0x20] sm:$0xff]
        %v335 = vld [vmem:[%s263 + $0x28] sm:$0xff]
        %v336 = vld [vmem:[%s263 + $0x30] sm:$0x3]
        %v337 = vld [vmem:[%s272] sm:$0xff]
        %v338 = vld [vmem:[%s272 + $0x8] sm:$0xff]
        %v339 = vld [vmem:[%s272 + $0x10] sm:$0xff]
        %v340 = vld [vmem:[%s272 + $0x18] sm:$0xff]
        %v341 = vld [vmem:[%s272 + $0x20] sm:$0xff]
        %v342 = vld [vmem:[%s272 + $0x28] sm:$0xff]
        %v343 = vld [vmem:[%s272 + $0x30] sm:$0x3]
        %vm344 = vcmp.eq.s32.totalorder %v330, %v337
        %vm345 = vcmp.eq.s32.totalorder %v331, %v338
        %vm346 = vcmp.eq.s32.totalorder %v332, %v339
        %vm347 = vcmp.eq.s32.totalorder %v333, %v340
        %vm348 = vcmp.eq.s32.totalorder %v334, %v341
        %vm349 = vcmp.eq.s32.totalorder %v335, %v342
        %vm350 = vcmp.eq.s32.totalorder %v336, %v343
        %v351 = vsel %vm344, 1, 0
        %v352 = vsel %vm345, 1, 0
        %v353 = vsel %vm346, 1, 0
        %v354 = vsel %vm347, 1, 0
        %v355 = vsel %vm348, 1, 0
        %v356 = vsel %vm349, 1, 0
        %v357 = vsel %vm350, 1, 0
        %v358 = vcvt.s32.f32 %v351
        %v359 = vcvt.s32.f32 %v352
        %v360 = vcvt.s32.f32 %v353
        %v361 = vcvt.s32.f32 %v354
        %v362 = vcvt.s32.f32 %v355
        %v363 = vcvt.s32.f32 %v356
        %v364 = vcvt.s32.f32 %v357
        %s365 = sadd.s32 %s27, %s28
        %s366 = smul.u32 %s365, 6400
        %v367 = vlaneseq
        %v368 = vshrl.u32 %v367, 7
        %v369 = vadd.s32 %v368, 8
        %v370 = vadd.s32 %v368, 16
        %v371 = vadd.s32 %v368, 24
        %v372 = vadd.s32 %v368, 32
        %v373 = vadd.s32 %v368, 40
        %v374 = vadd.s32 %v368, 48
        %v375 = vlaneseq
        %v376 = vand.u32 %v375, 127
        %v377 = vmul.u32 %v368, 128
        %v378 = vmul.u32 %v369, 128
        %v379 = vmul.u32 %v370, 128
        %v380 = vmul.u32 %v371, 128
        %v381 = vmul.u32 %v372, 128
        %v382 = vmul.u32 %v373, 128
        %v383 = vmul.u32 %v374, 128
        %v384 = vstv %s366
        %v385 = vadd.s32 %v384, %v377
        %v386 = vadd.s32 %v384, %v378
        %v387 = vadd.s32 %v384, %v379
        %v388 = vadd.s32 %v384, %v380
        %v389 = vadd.s32 %v384, %v381
        %v390 = vadd.s32 %v384, %v382
        %v391 = vadd.s32 %v384, %v383
        %v392 = vadd.s32 %v385, %v376
        %v393 = vadd.s32 %v386, %v376
        %v394 = vadd.s32 %v387, %v376
        %v395 = vadd.s32 %v388, %v376
        %v396 = vadd.s32 %v389, %v376
        %v397 = vadd.s32 %v390, %v376
        %v398 = vadd.s32 %v391, %v376
        %vm399 = vcmp.lt.s32.totalorder %v392, 6400
        %vm400 = vcmp.lt.s32.totalorder %v393, 6400
        %vm401 = vcmp.lt.s32.totalorder %v394, 6400
        %vm402 = vcmp.lt.s32.totalorder %v395, 6400
        %vm403 = vcmp.lt.s32.totalorder %v396, 6400
        %vm404 = vcmp.lt.s32.totalorder %v397, 6400
        %vm405 = vcmp.lt.s32.totalorder %v398, 6400
        %v406 = vsel %vm399, %v323, -1.0
        %v407 = vsel %vm400, %v324, -1.0
        %v408 = vsel %vm401, %v325, -1.0
        %v409 = vsel %vm402, %v326, -1.0
        %v410 = vsel %vm403, %v327, -1.0
        %v411 = vsel %vm404, %v328, -1.0
        %v412 = vsel %vm405, %v329, -1.0
        %v413 = vsub.f32 %v406, %v358
        %v414 = vsub.f32 %v407, %v359
        %v415 = vsub.f32 %v408, %v360
        %v416 = vsub.f32 %v409, %v361
        %v417 = vsub.f32 %v410, %v362
        %v418 = vsub.f32 %v411, %v363
        %v419 = vsub.f32 %v412, %v364
        %vm420 = vcmp.gt.f32.partialorder %v406, 0.0
        %vm421 = vcmp.gt.f32.partialorder %v407, 0.0
        %vm422 = vcmp.gt.f32.partialorder %v408, 0.0
        %vm423 = vcmp.gt.f32.partialorder %v409, 0.0
        %vm424 = vcmp.gt.f32.partialorder %v410, 0.0
        %vm425 = vcmp.gt.f32.partialorder %v411, 0.0
        %vm426 = vcmp.gt.f32.partialorder %v412, 0.0
        %vm427 = vcmp.gt.f32.partialorder %v406, 0.06666667
        %vm428 = vcmp.gt.f32.partialorder %v407, 0.06666667
        %vm429 = vcmp.gt.f32.partialorder %v408, 0.06666667
        %vm430 = vcmp.gt.f32.partialorder %v409, 0.06666667
        %vm431 = vcmp.gt.f32.partialorder %v410, 0.06666667
        %vm432 = vcmp.gt.f32.partialorder %v411, 0.06666667
        %vm433 = vcmp.gt.f32.partialorder %v412, 0.06666667
        %vm434 = vcmp.gt.f32.partialorder %v406, 0.13333334
        %vm435 = vcmp.gt.f32.partialorder %v407, 0.13333334
        %vm436 = vcmp.gt.f32.partialorder %v408, 0.13333334
        %vm437 = vcmp.gt.f32.partialorder %v409, 0.13333334
        %vm438 = vcmp.gt.f32.partialorder %v410, 0.13333334
        %vm439 = vcmp.gt.f32.partialorder %v411, 0.13333334
        %vm440 = vcmp.gt.f32.partialorder %v412, 0.13333334
        %vm441 = vcmp.gt.f32.partialorder %v406, 0.2
        %vm442 = vcmp.gt.f32.partialorder %v407, 0.2
        %vm443 = vcmp.gt.f32.partialorder %v408, 0.2
        %vm444 = vcmp.gt.f32.partialorder %v409, 0.2
        %vm445 = vcmp.gt.f32.partialorder %v410, 0.2
        %vm446 = vcmp.gt.f32.partialorder %v411, 0.2
        %vm447 = vcmp.gt.f32.partialorder %v412, 0.2
        %vm448 = vcmp.gt.f32.partialorder %v406, 0.26666668
        %vm449 = vcmp.gt.f32.partialorder %v407, 0.26666668
        %vm450 = vcmp.gt.f32.partialorder %v408, 0.26666668
        %vm451 = vcmp.gt.f32.partialorder %v409, 0.26666668
        %vm452 = vcmp.gt.f32.partialorder %v410, 0.26666668
        %vm453 = vcmp.gt.f32.partialorder %v411, 0.26666668
        %vm454 = vcmp.gt.f32.partialorder %v412, 0.26666668
        %vm455 = vcmp.gt.f32.partialorder %v406, 0.33333334
        %vm456 = vcmp.gt.f32.partialorder %v407, 0.33333334
        %vm457 = vcmp.gt.f32.partialorder %v408, 0.33333334
        %vm458 = vcmp.gt.f32.partialorder %v409, 0.33333334
        %vm459 = vcmp.gt.f32.partialorder %v410, 0.33333334
        %vm460 = vcmp.gt.f32.partialorder %v411, 0.33333334
        %vm461 = vcmp.gt.f32.partialorder %v412, 0.33333334
        %vm462 = vcmp.gt.f32.partialorder %v406, 0.4
        %vm463 = vcmp.gt.f32.partialorder %v407, 0.4
        %vm464 = vcmp.gt.f32.partialorder %v408, 0.4
        %vm465 = vcmp.gt.f32.partialorder %v409, 0.4
        %vm466 = vcmp.gt.f32.partialorder %v410, 0.4
        %vm467 = vcmp.gt.f32.partialorder %v411, 0.4
        %vm468 = vcmp.gt.f32.partialorder %v412, 0.4
        %vm469 = vcmp.gt.f32.partialorder %v406, 0.46666667
        %vm470 = vcmp.gt.f32.partialorder %v407, 0.46666667
        %vm471 = vcmp.gt.f32.partialorder %v408, 0.46666667
        %vm472 = vcmp.gt.f32.partialorder %v409, 0.46666667
        %vm473 = vcmp.gt.f32.partialorder %v410, 0.46666667
        %vm474 = vcmp.gt.f32.partialorder %v411, 0.46666667
        %vm475 = vcmp.gt.f32.partialorder %v412, 0.46666667
        %vm476 = vcmp.gt.f32.partialorder %v406, 0.53333336
        %vm477 = vcmp.gt.f32.partialorder %v407, 0.53333336
        %vm478 = vcmp.gt.f32.partialorder %v408, 0.53333336
        %vm479 = vcmp.gt.f32.partialorder %v409, 0.53333336
        %vm480 = vcmp.gt.f32.partialorder %v410, 0.53333336
        %vm481 = vcmp.gt.f32.partialorder %v411, 0.53333336
        %vm482 = vcmp.gt.f32.partialorder %v412, 0.53333336
        %vm483 = vcmp.gt.f32.partialorder %v406, 0.6
        %vm484 = vcmp.gt.f32.partialorder %v407, 0.6
        %vm485 = vcmp.gt.f32.partialorder %v408, 0.6
        %vm486 = vcmp.gt.f32.partialorder %v409, 0.6
        %vm487 = vcmp.gt.f32.partialorder %v410, 0.6
        %vm488 = vcmp.gt.f32.partialorder %v411, 0.6
        %vm489 = vcmp.gt.f32.partialorder %v412, 0.6
        %vm490 = vcmp.gt.f32.partialorder %v406, 0.6666667
        %vm491 = vcmp.gt.f32.partialorder %v407, 0.6666667
        %vm492 = vcmp.gt.f32.partialorder %v408, 0.6666667
        %vm493 = vcmp.gt.f32.partialorder %v409, 0.6666667
        %vm494 = vcmp.gt.f32.partialorder %v410, 0.6666667
        %vm495 = vcmp.gt.f32.partialorder %v411, 0.6666667
        %vm496 = vcmp.gt.f32.partialorder %v412, 0.6666667
        %vm497 = vcmp.gt.f32.partialorder %v406, 0.73333335
        %vm498 = vcmp.gt.f32.partialorder %v407, 0.73333335
        %vm499 = vcmp.gt.f32.partialorder %v408, 0.73333335
        %vm500 = vcmp.gt.f32.partialorder %v409, 0.73333335
        %vm501 = vcmp.gt.f32.partialorder %v410, 0.73333335
        %vm502 = vcmp.gt.f32.partialorder %v411, 0.73333335
        %vm503 = vcmp.gt.f32.partialorder %v412, 0.73333335
        %vm504 = vcmp.gt.f32.partialorder %v406, 0.8
        %vm505 = vcmp.gt.f32.partialorder %v407, 0.8
        %vm506 = vcmp.gt.f32.partialorder %v408, 0.8
        %vm507 = vcmp.gt.f32.partialorder %v409, 0.8
        %vm508 = vcmp.gt.f32.partialorder %v410, 0.8
        %vm509 = vcmp.gt.f32.partialorder %v411, 0.8
        %vm510 = vcmp.gt.f32.partialorder %v412, 0.8
        %vm511 = vcmp.gt.f32.partialorder %v406, 0.8666667
        %vm512 = vcmp.gt.f32.partialorder %v407, 0.8666667
        %vm513 = vcmp.gt.f32.partialorder %v408, 0.8666667
        %vm514 = vcmp.gt.f32.partialorder %v409, 0.8666667
        %vm515 = vcmp.gt.f32.partialorder %v410, 0.8666667
        %vm516 = vcmp.gt.f32.partialorder %v411, 0.8666667
        %vm517 = vcmp.gt.f32.partialorder %v412, 0.8666667
        %vm518 = vcmp.gt.f32.partialorder %v406, 0.93333334
        %vm519 = vcmp.gt.f32.partialorder %v407, 0.93333334
        %vm520 = vcmp.gt.f32.partialorder %v408, 0.93333334
        %vm521 = vcmp.gt.f32.partialorder %v409, 0.93333334
        %vm522 = vcmp.gt.f32.partialorder %v410, 0.93333334
        %vm523 = vcmp.gt.f32.partialorder %v411, 0.93333334
        %vm524 = vcmp.gt.f32.partialorder %v412, 0.93333334
        %vm525 = vcmp.gt.f32.partialorder %v406, 1.0
        %vm526 = vcmp.gt.f32.partialorder %v407, 1.0
        %vm527 = vcmp.gt.f32.partialorder %v408, 1.0
        %vm528 = vcmp.gt.f32.partialorder %v409, 1.0
        %vm529 = vcmp.gt.f32.partialorder %v410, 1.0
        %vm530 = vcmp.gt.f32.partialorder %v411, 1.0
        %vm531 = vcmp.gt.f32.partialorder %v412, 1.0
        %vm532 = vmxor %vm427, 1
        %vm533 = vmxor %vm428, 1
        %vm534 = vmxor %vm429, 1
        %vm535 = vmxor %vm430, 1
        %vm536 = vmxor %vm431, 1
        %vm537 = vmxor %vm432, 1
        %vm538 = vmxor %vm433, 1
        %vm539 = vmand %vm420, %vm532
        %vm540 = vmand %vm421, %vm533
        %vm541 = vmand %vm422, %vm534
        %vm542 = vmand %vm423, %vm535
        %vm543 = vmand %vm424, %vm536
        %vm544 = vmand %vm425, %vm537
        %vm545 = vmand %vm426, %vm538
        %v546 = vsel %vm539, %v413, 0.0
        %v547 = vsel %vm540, %v414, 0.0
        %v548 = vsel %vm541, %v415, 0.0
        %v549 = vsel %vm542, %v416, 0.0
        %v550 = vsel %vm543, %v417, 0.0
        %v551 = vsel %vm544, %v418, 0.0
        %v552 = vsel %vm545, %v419, 0.0
        %v553 = vadd.f32 %v546, %v547
        %v554 = vadd.f32 %v553, %v548
        %v555 = vadd.f32 %v554, %v549
        %v556 = vadd.f32 %v555, %v550
        %v557 = vadd.f32 %v556, %v551
        %vm558 = vcmask 1041408
        %v559 = vsel %vm558, %v552, 0.0
        %v560 = vadd.f32 %v557, %v559
        %v561 = vrot.slane %v560, 4
        %v562 = vadd.f32 %v560, %v561
        %v563 = vrot.slane %v562, 2
        %v564 = vadd.f32 %v562, %v563
        %v565 = vrot.slane %v564, 1
        %v566 = vadd.f32 %v564, %v565
        %vm567 = vmxor %vm434, 1
        %vm568 = vmxor %vm435, 1
        %vm569 = vmxor %vm436, 1
        %vm570 = vmxor %vm437, 1
        %vm571 = vmxor %vm438, 1
        %vm572 = vmxor %vm439, 1
        %vm573 = vmxor %vm440, 1
        %vm574 = vmand %vm427, %vm567
        %vm575 = vmand %vm428, %vm568
        %vm576 = vmand %vm429, %vm569
        %vm577 = vmand %vm430, %vm570
        %vm578 = vmand %vm431, %vm571
        %vm579 = vmand %vm432, %vm572
        %vm580 = vmand %vm433, %vm573
        %v581 = vsel %vm574, %v413, 0.0
        %v582 = vsel %vm575, %v414, 0.0
        %v583 = vsel %vm576, %v415, 0.0
        %v584 = vsel %vm577, %v416, 0.0
        %v585 = vsel %vm578, %v417, 0.0
        %v586 = vsel %vm579, %v418, 0.0
        %v587 = vsel %vm580, %v419, 0.0
        %v588 = vadd.f32 %v581, %v582
        %v589 = vadd.f32 %v588, %v583
        %v590 = vadd.f32 %v589, %v584
        %v591 = vadd.f32 %v590, %v585
        %v592 = vadd.f32 %v591, %v586
        %v593 = vsel %vm558, %v587, 0.0
        %v594 = vadd.f32 %v592, %v593
        %v595 = vrot.slane %v594, 4
        %v596 = vadd.f32 %v594, %v595
        %v597 = vrot.slane %v596, 2
        %v598 = vadd.f32 %v596, %v597
        %v599 = vrot.slane %v598, 1
        %v600 = vadd.f32 %v598, %v599
        %vm601 = vmxor %vm441, 1
        %vm602 = vmxor %vm442, 1
        %vm603 = vmxor %vm443, 1
        %vm604 = vmxor %vm444, 1
        %vm605 = vmxor %vm445, 1
        %vm606 = vmxor %vm446, 1
        %vm607 = vmxor %vm447, 1
        %vm608 = vmand %vm434, %vm601
        %vm609 = vmand %vm435, %vm602
        %vm610 = vmand %vm436, %vm603
        %vm611 = vmand %vm437, %vm604
        %vm612 = vmand %vm438, %vm605
        %vm613 = vmand %vm439, %vm606
        %vm614 = vmand %vm440, %vm607
        %v615 = vsel %vm608, %v413, 0.0
        %v616 = vsel %vm609, %v414, 0.0
        %v617 = vsel %vm610, %v415, 0.0
        %v618 = vsel %vm611, %v416, 0.0
        %v619 = vsel %vm612, %v417, 0.0
        %v620 = vsel %vm613, %v418, 0.0
        %v621 = vsel %vm614, %v419, 0.0
        %v622 = vadd.f32 %v615, %v616
        %v623 = vadd.f32 %v622, %v617
        %v624 = vadd.f32 %v623, %v618
        %v625 = vadd.f32 %v624, %v619
        %v626 = vadd.f32 %v625, %v620
        %v627 = vsel %vm558, %v621, 0.0
        %v628 = vadd.f32 %v626, %v627
        %v629 = vrot.slane %v628, 4
        %v630 = vadd.f32 %v628, %v629
        %v631 = vrot.slane %v630, 2
        %v632 = vadd.f32 %v630, %v631
        %v633 = vrot.slane %v632, 1
        %v634 = vadd.f32 %v632, %v633
        %vm635 = vmxor %vm448, 1
        %vm636 = vmxor %vm449, 1
        %vm637 = vmxor %vm450, 1
        %vm638 = vmxor %vm451, 1
        %vm639 = vmxor %vm452, 1
        %vm640 = vmxor %vm453, 1
        %vm641 = vmxor %vm454, 1
        %vm642 = vmand %vm441, %vm635
        %vm643 = vmand %vm442, %vm636
        %vm644 = vmand %vm443, %vm637
        %vm645 = vmand %vm444, %vm638
        %vm646 = vmand %vm445, %vm639
        %vm647 = vmand %vm446, %vm640
        %vm648 = vmand %vm447, %vm641
        %v649 = vsel %vm642, %v413, 0.0
        %v650 = vsel %vm643, %v414, 0.0
        %v651 = vsel %vm644, %v415, 0.0
        %v652 = vsel %vm645, %v416, 0.0
        %v653 = vsel %vm646, %v417, 0.0
        %v654 = vsel %vm647, %v418, 0.0
        %v655 = vsel %vm648, %v419, 0.0
        %v656 = vadd.f32 %v649, %v650
        %v657 = vadd.f32 %v656, %v651
        %v658 = vadd.f32 %v657, %v652
        %v659 = vadd.f32 %v658, %v653
        %v660 = vadd.f32 %v659, %v654
        %v661 = vsel %vm558, %v655, 0.0
        %v662 = vadd.f32 %v660, %v661
        %v663 = vrot.slane %v662, 4
        %v664 = vadd.f32 %v662, %v663
        %v665 = vrot.slane %v664, 2
        %v666 = vadd.f32 %v664, %v665
        %v667 = vrot.slane %v666, 1
        %v668 = vadd.f32 %v666, %v667
        %vm669 = vmxor %vm455, 1
        %vm670 = vmxor %vm456, 1
        %vm671 = vmxor %vm457, 1
        %vm672 = vmxor %vm458, 1
        %vm673 = vmxor %vm459, 1
        %vm674 = vmxor %vm460, 1
        %vm675 = vmxor %vm461, 1
        %vm676 = vmand %vm448, %vm669
        %vm677 = vmand %vm449, %vm670
        %vm678 = vmand %vm450, %vm671
        %vm679 = vmand %vm451, %vm672
        %vm680 = vmand %vm452, %vm673
        %vm681 = vmand %vm453, %vm674
        %vm682 = vmand %vm454, %vm675
        %v683 = vsel %vm676, %v413, 0.0
        %v684 = vsel %vm677, %v414, 0.0
        %v685 = vsel %vm678, %v415, 0.0
        %v686 = vsel %vm679, %v416, 0.0
        %v687 = vsel %vm680, %v417, 0.0
        %v688 = vsel %vm681, %v418, 0.0
        %v689 = vsel %vm682, %v419, 0.0
        %v690 = vadd.f32 %v683, %v684
        %v691 = vadd.f32 %v690, %v685
        %v692 = vadd.f32 %v691, %v686
        %v693 = vadd.f32 %v692, %v687
        %v694 = vadd.f32 %v693, %v688
        %v695 = vsel %vm558, %v689, 0.0
        %v696 = vadd.f32 %v694, %v695
        %v697 = vrot.slane %v696, 4
        %v698 = vadd.f32 %v696, %v697
        %v699 = vrot.slane %v698, 2
        %v700 = vadd.f32 %v698, %v699
        %v701 = vrot.slane %v700, 1
        %v702 = vadd.f32 %v700, %v701
        %vm703 = vmxor %vm462, 1
        %vm704 = vmxor %vm463, 1
        %vm705 = vmxor %vm464, 1
        %vm706 = vmxor %vm465, 1
        %vm707 = vmxor %vm466, 1
        %vm708 = vmxor %vm467, 1
        %vm709 = vmxor %vm468, 1
        %vm710 = vmand %vm455, %vm703
        %vm711 = vmand %vm456, %vm704
        %vm712 = vmand %vm457, %vm705
        %vm713 = vmand %vm458, %vm706
        %vm714 = vmand %vm459, %vm707
        %vm715 = vmand %vm460, %vm708
        %vm716 = vmand %vm461, %vm709
        %v717 = vsel %vm710, %v413, 0.0
        %v718 = vsel %vm711, %v414, 0.0
        %v719 = vsel %vm712, %v415, 0.0
        %v720 = vsel %vm713, %v416, 0.0
        %v721 = vsel %vm714, %v417, 0.0
        %v722 = vsel %vm715, %v418, 0.0
        %v723 = vsel %vm716, %v419, 0.0
        %v724 = vadd.f32 %v717, %v718
        %v725 = vadd.f32 %v724, %v719
        %v726 = vadd.f32 %v725, %v720
        %v727 = vadd.f32 %v726, %v721
        %v728 = vadd.f32 %v727, %v722
        %v729 = vsel %vm558, %v723, 0.0
        %v730 = vadd.f32 %v728, %v729
        %v731 = vrot.slane %v730, 4
        %v732 = vadd.f32 %v730, %v731
        %v733 = vrot.slane %v732, 2
        %v734 = vadd.f32 %v732, %v733
        %v735 = vrot.slane %v734, 1
        %v736 = vadd.f32 %v734, %v735
        %vm737 = vmxor %vm469, 1
        %vm738 = vmxor %vm470, 1
        %vm739 = vmxor %vm471, 1
        %vm740 = vmxor %vm472, 1
        %vm741 = vmxor %vm473, 1
        %vm742 = vmxor %vm474, 1
        %vm743 = vmxor %vm475, 1
        %vm744 = vmand %vm462, %vm737
        %vm745 = vmand %vm463, %vm738
        %vm746 = vmand %vm464, %vm739
        %vm747 = vmand %vm465, %vm740
        %vm748 = vmand %vm466, %vm741
        %vm749 = vmand %vm467, %vm742
        %vm750 = vmand %vm468, %vm743
        %v751 = vsel %vm744, %v413, 0.0
        %v752 = vsel %vm745, %v414, 0.0
        %v753 = vsel %vm746, %v415, 0.0
        %v754 = vsel %vm747, %v416, 0.0
        %v755 = vsel %vm748, %v417, 0.0
        %v756 = vsel %vm749, %v418, 0.0
        %v757 = vsel %vm750, %v419, 0.0
        %v758 = vadd.f32 %v751, %v752
        %v759 = vadd.f32 %v758, %v753
        %v760 = vadd.f32 %v759, %v754
        %v761 = vadd.f32 %v760, %v755
        %v762 = vadd.f32 %v761, %v756
        %v763 = vsel %vm558, %v757, 0.0
        %v764 = vadd.f32 %v762, %v763
        %v765 = vrot.slane %v764, 4
        %v766 = vadd.f32 %v764, %v765
        %v767 = vrot.slane %v766, 2
        %v768 = vadd.f32 %v766, %v767
        %v769 = vrot.slane %v768, 1
        %v770 = vadd.f32 %v768, %v769
        %vm771 = vmxor %vm476, 1
        %vm772 = vmxor %vm477, 1
        %vm773 = vmxor %vm478, 1
        %vm774 = vmxor %vm479, 1
        %vm775 = vmxor %vm480, 1
        %vm776 = vmxor %vm481, 1
        %vm777 = vmxor %vm482, 1
        %vm778 = vmand %vm469, %vm771
        %vm779 = vmand %vm470, %vm772
        %vm780 = vmand %vm471, %vm773
        %vm781 = vmand %vm472, %vm774
        %vm782 = vmand %vm473, %vm775
        %vm783 = vmand %vm474, %vm776
        %vm784 = vmand %vm475, %vm777
        %v785 = vsel %vm778, %v413, 0.0
        %v786 = vsel %vm779, %v414, 0.0
        %v787 = vsel %vm780, %v415, 0.0
        %v788 = vsel %vm781, %v416, 0.0
        %v789 = vsel %vm782, %v417, 0.0
        %v790 = vsel %vm783, %v418, 0.0
        %v791 = vsel %vm784, %v419, 0.0
        %v792 = vadd.f32 %v785, %v786
        %v793 = vadd.f32 %v792, %v787
        %v794 = vadd.f32 %v793, %v788
        %v795 = vadd.f32 %v794, %v789
        %v796 = vadd.f32 %v795, %v790
        %v797 = vsel %vm558, %v791, 0.0
        %v798 = vadd.f32 %v796, %v797
        %v799 = vrot.slane %v798, 4
        %v800 = vadd.f32 %v798, %v799
        %v801 = vrot.slane %v800, 2
        %v802 = vadd.f32 %v800, %v801
        %v803 = vrot.slane %v802, 1
        %v804 = vadd.f32 %v802, %v803
        %vm805 = vmxor %vm483, 1
        %vm806 = vmxor %vm484, 1
        %vm807 = vmxor %vm485, 1
        %vm808 = vmxor %vm486, 1
        %vm809 = vmxor %vm487, 1
        %vm810 = vmxor %vm488, 1
        %vm811 = vmxor %vm489, 1
        %vm812 = vmand %vm476, %vm805
        %vm813 = vmand %vm477, %vm806
        %vm814 = vmand %vm478, %vm807
        %vm815 = vmand %vm479, %vm808
        %vm816 = vmand %vm480, %vm809
        %vm817 = vmand %vm481, %vm810
        %vm818 = vmand %vm482, %vm811
        %v819 = vsel %vm812, %v413, 0.0
        %v820 = vsel %vm813, %v414, 0.0
        %v821 = vsel %vm814, %v415, 0.0
        %v822 = vsel %vm815, %v416, 0.0
        %v823 = vsel %vm816, %v417, 0.0
        %v824 = vsel %vm817, %v418, 0.0
        %v825 = vsel %vm818, %v419, 0.0
        %v826 = vadd.f32 %v819, %v820
        %v827 = vadd.f32 %v826, %v821
        %v828 = vadd.f32 %v827, %v822
        %v829 = vadd.f32 %v828, %v823
        %v830 = vadd.f32 %v829, %v824
        %v831 = vsel %vm558, %v825, 0.0
        %v832 = vadd.f32 %v830, %v831
        %v833 = vrot.slane %v832, 4
        %v834 = vadd.f32 %v832, %v833
        %v835 = vrot.slane %v834, 2
        %v836 = vadd.f32 %v834, %v835
        %v837 = vrot.slane %v836, 1
        %v838 = vadd.f32 %v836, %v837
        %vm839 = vmxor %vm490, 1
        %vm840 = vmxor %vm491, 1
        %vm841 = vmxor %vm492, 1
        %vm842 = vmxor %vm493, 1
        %vm843 = vmxor %vm494, 1
        %vm844 = vmxor %vm495, 1
        %vm845 = vmxor %vm496, 1
        %vm846 = vmand %vm483, %vm839
        %vm847 = vmand %vm484, %vm840
        %vm848 = vmand %vm485, %vm841
        %vm849 = vmand %vm486, %vm842
        %vm850 = vmand %vm487, %vm843
        %vm851 = vmand %vm488, %vm844
        %vm852 = vmand %vm489, %vm845
        %v853 = vsel %vm846, %v413, 0.0
        %v854 = vsel %vm847, %v414, 0.0
        %v855 = vsel %vm848, %v415, 0.0
        %v856 = vsel %vm849, %v416, 0.0
        %v857 = vsel %vm850, %v417, 0.0
        %v858 = vsel %vm851, %v418, 0.0
        %v859 = vsel %vm852, %v419, 0.0
        %v860 = vadd.f32 %v853, %v854
        %v861 = vadd.f32 %v860, %v855
        %v862 = vadd.f32 %v861, %v856
        %v863 = vadd.f32 %v862, %v857
        %v864 = vadd.f32 %v863, %v858
        %v865 = vsel %vm558, %v859, 0.0
        %v866 = vadd.f32 %v864, %v865
        %v867 = vrot.slane %v866, 4
        %v868 = vadd.f32 %v866, %v867
        %v869 = vrot.slane %v868, 2
        %v870 = vadd.f32 %v868, %v869
        %v871 = vrot.slane %v870, 1
        %v872 = vadd.f32 %v870, %v871
        %vm873 = vmxor %vm497, 1
        %vm874 = vmxor %vm498, 1
        %vm875 = vmxor %vm499, 1
        %vm876 = vmxor %vm500, 1
        %vm877 = vmxor %vm501, 1
        %vm878 = vmxor %vm502, 1
        %vm879 = vmxor %vm503, 1
        %vm880 = vmand %vm490, %vm873
        %vm881 = vmand %vm491, %vm874
        %vm882 = vmand %vm492, %vm875
        %vm883 = vmand %vm493, %vm876
        %vm884 = vmand %vm494, %vm877
        %vm885 = vmand %vm495, %vm878
        %vm886 = vmand %vm496, %vm879
        %v887 = vsel %vm880, %v413, 0.0
        %v888 = vsel %vm881, %v414, 0.0
        %v889 = vsel %vm882, %v415, 0.0
        %v890 = vsel %vm883, %v416, 0.0
        %v891 = vsel %vm884, %v417, 0.0
        %v892 = vsel %vm885, %v418, 0.0
        %v893 = vsel %vm886, %v419, 0.0
        %v894 = vadd.f32 %v887, %v888
        %v895 = vadd.f32 %v894, %v889
        %v896 = vadd.f32 %v895, %v890
        %v897 = vadd.f32 %v896, %v891
        %v898 = vadd.f32 %v897, %v892
        %v899 = vsel %vm558, %v893, 0.0
        %v900 = vadd.f32 %v898, %v899
        %v901 = vrot.slane %v900, 4
        %v902 = vadd.f32 %v900, %v901
        %v903 = vrot.slane %v902, 2
        %v904 = vadd.f32 %v902, %v903
        %v905 = vrot.slane %v904, 1
        %v906 = vadd.f32 %v904, %v905
        %vm907 = vmxor %vm504, 1
        %vm908 = vmxor %vm505, 1
        %vm909 = vmxor %vm506, 1
        %vm910 = vmxor %vm507, 1
        %vm911 = vmxor %vm508, 1
        %vm912 = vmxor %vm509, 1
        %vm913 = vmxor %vm510, 1
        %vm914 = vmand %vm497, %vm907
        %vm915 = vmand %vm498, %vm908
        %vm916 = vmand %vm499, %vm909
        %vm917 = vmand %vm500, %vm910
        %vm918 = vmand %vm501, %vm911
        %vm919 = vmand %vm502, %vm912
        %vm920 = vmand %vm503, %vm913
        %v921 = vsel %vm914, %v413, 0.0
        %v922 = vsel %vm915, %v414, 0.0
        %v923 = vsel %vm916, %v415, 0.0
        %v924 = vsel %vm917, %v416, 0.0
        %v925 = vsel %vm918, %v417, 0.0
        %v926 = vsel %vm919, %v418, 0.0
        %v927 = vsel %vm920, %v419, 0.0
        %v928 = vadd.f32 %v921, %v922
        %v929 = vadd.f32 %v928, %v923
        %v930 = vadd.f32 %v929, %v924
        %v931 = vadd.f32 %v930, %v925
        %v932 = vadd.f32 %v931, %v926
        %v933 = vsel %vm558, %v927, 0.0
        %v934 = vadd.f32 %v932, %v933
        %v935 = vrot.slane %v934, 4
        %v936 = vadd.f32 %v934, %v935
        %v937 = vrot.slane %v936, 2
        %v938 = vadd.f32 %v936, %v937
        %v939 = vrot.slane %v938, 1
        %v940 = vadd.f32 %v938, %v939
        %vm941 = vmxor %vm511, 1
        %vm942 = vmxor %vm512, 1
        %vm943 = vmxor %vm513, 1
        %vm944 = vmxor %vm514, 1
        %vm945 = vmxor %vm515, 1
        %vm946 = vmxor %vm516, 1
        %vm947 = vmxor %vm517, 1
        %vm948 = vmand %vm504, %vm941
        %vm949 = vmand %vm505, %vm942
        %vm950 = vmand %vm506, %vm943
        %vm951 = vmand %vm507, %vm944
        %vm952 = vmand %vm508, %vm945
        %vm953 = vmand %vm509, %vm946
        %vm954 = vmand %vm510, %vm947
        %v955 = vsel %vm948, %v413, 0.0
        %v956 = vsel %vm949, %v414, 0.0
        %v957 = vsel %vm950, %v415, 0.0
        %v958 = vsel %vm951, %v416, 0.0
        %v959 = vsel %vm952, %v417, 0.0
        %v960 = vsel %vm953, %v418, 0.0
        %v961 = vsel %vm954, %v419, 0.0
        %v962 = vadd.f32 %v955, %v956
        %v963 = vadd.f32 %v962, %v957
        %v964 = vadd.f32 %v963, %v958
        %v965 = vadd.f32 %v964, %v959
        %v966 = vadd.f32 %v965, %v960
        %v967 = vsel %vm558, %v961, 0.0
        %v968 = vadd.f32 %v966, %v967
        %v969 = vrot.slane %v968, 4
        %v970 = vadd.f32 %v968, %v969
        %v971 = vrot.slane %v970, 2
        %v972 = vadd.f32 %v970, %v971
        %v973 = vrot.slane %v972, 1
        %v974 = vadd.f32 %v972, %v973
        %vm975 = vmxor %vm518, 1
        %vm976 = vmxor %vm519, 1
        %vm977 = vmxor %vm520, 1
        %vm978 = vmxor %vm521, 1
        %vm979 = vmxor %vm522, 1
        %vm980 = vmxor %vm523, 1
        %vm981 = vmxor %vm524, 1
        %vm982 = vmand %vm511, %vm975
        %vm983 = vmand %vm512, %vm976
        %vm984 = vmand %vm513, %vm977
        %vm985 = vmand %vm514, %vm978
        %vm986 = vmand %vm515, %vm979
        %vm987 = vmand %vm516, %vm980
        %vm988 = vmand %vm517, %vm981
        %v989 = vsel %vm982, %v413, 0.0
        %v990 = vsel %vm983, %v414, 0.0
        %v991 = vsel %vm984, %v415, 0.0
        %v992 = vsel %vm985, %v416, 0.0
        %v993 = vsel %vm986, %v417, 0.0
        %v994 = vsel %vm987, %v418, 0.0
        %v995 = vsel %vm988, %v419, 0.0
        %v996 = vadd.f32 %v989, %v990
        %v997 = vadd.f32 %v996, %v991
        %v998 = vadd.f32 %v997, %v992
        %v999 = vadd.f32 %v998, %v993
        %v1000 = vadd.f32 %v999, %v994
        %v1001 = vsel %vm558, %v995, 0.0
        %v1002 = vadd.f32 %v1000, %v1001
        %v1003 = vrot.slane %v1002, 4
        %v1004 = vadd.f32 %v1002, %v1003
        %v1005 = vrot.slane %v1004, 2
        %v1006 = vadd.f32 %v1004, %v1005
        %v1007 = vrot.slane %v1006, 1
        %v1008 = vadd.f32 %v1006, %v1007
        %vm1009 = vmxor %vm525, 1
        %vm1010 = vmxor %vm526, 1
        %vm1011 = vmxor %vm527, 1
        %vm1012 = vmxor %vm528, 1
        %vm1013 = vmxor %vm529, 1
        %vm1014 = vmxor %vm530, 1
        %vm1015 = vmxor %vm531, 1
        %vm1016 = vmand %vm518, %vm1009
        %vm1017 = vmand %vm519, %vm1010
        %vm1018 = vmand %vm520, %vm1011
        %vm1019 = vmand %vm521, %vm1012
        %vm1020 = vmand %vm522, %vm1013
        %vm1021 = vmand %vm523, %vm1014
        %vm1022 = vmand %vm524, %vm1015
        %v1023 = vsel %vm1016, %v413, 0.0
        %v1024 = vsel %vm1017, %v414, 0.0
        %v1025 = vsel %vm1018, %v415, 0.0
        %v1026 = vsel %vm1019, %v416, 0.0
        %v1027 = vsel %vm1020, %v417, 0.0
        %v1028 = vsel %vm1021, %v418, 0.0
        %v1029 = vsel %vm1022, %v419, 0.0
        %v1030 = vadd.f32 %v1023, %v1024
        %v1031 = vadd.f32 %v1030, %v1025
        %v1032 = vadd.f32 %v1031, %v1026
        %v1033 = vadd.f32 %v1032, %v1027
        %v1034 = vadd.f32 %v1033, %v1028
        %v1035 = vsel %vm558, %v1029, 0.0
        %v1036 = vadd.f32 %v1034, %v1035
        %v1037 = vrot.slane %v1036, 4
        %v1038 = vadd.f32 %v1036, %v1037
        %v1039 = vrot.slane %v1038, 2
        %v1040 = vadd.f32 %v1038, %v1039
        %v1041 = vrot.slane %v1040, 1
        %v1042 = vadd.f32 %v1040, %v1041
        %v1043 = vld [vmem:[%s304] sm:$0xff]
        %v1044 = vld [vmem:[%s304 + $0x8] sm:$0xff]
        %vm1045 = vcmask 1040384
        %v1046 = vsel %vm1045, %v566, %v600
        %v1047 = vsel %vm558, %v1046, %v634
        %vm1048 = vcmask 1042432
        %v1049 = vsel %vm1048, %v1047, %v668
        %vm1050 = vcmask 1043456
        %v1051 = vsel %vm1050, %v1049, %v702
        %vm1052 = vcmask 1044480
        %v1053 = vsel %vm1052, %v1051, %v736
        %vm1054 = vcmask 1045504
        %v1055 = vsel %vm1054, %v1053, %v770
        %vm1056 = vcmask 1046528
        %v1057 = vsel %vm1056, %v1055, %v804
        %v1058 = vsel %vm1045, %v838, %v872
        %v1059 = vsel %vm558, %v1058, %v906
        %v1060 = vsel %vm1048, %v1059, %v940
        %v1061 = vsel %vm1050, %v1060, %v974
        %v1062 = vsel %vm1052, %v1061, %v1008
        %v1063 = vsel %vm1054, %v1062, %v1042
        %v1064 = vsel %vm1056, %v1063, 0.0
        %v1065 = vadd.f32 %v1043, %v1057
        %v1066 = vadd.f32 %v1044, %v1064
        %1067 = vst [vmem:[%s304] sm:$0xff] %v1065
        %1068 = vst [vmem:[%s304 + $0x8] sm:$0xff] %v1066
        %s1069 = sand.u32 %s139, 1
        %s1070 = scalar_lea.sflag [#allocation4], %s1069
        %s1071 = sand.u32 %s139, 1
        %s1072 = smul.addr %s1071, 16
        %s1073 = scalar_lea.vmem [#allocation8], %s1072
        // Predicated region
        $region49: #{tpu_custom_call.1} parent=31 // pred_check
          %p1074 = pneg %p149
        $region50: #{tpu_custom_call.1} parent=31 // pred_check_branch
          %1076 = sbr.rel (%p1074) target = $region52
        $region51: #{tpu_custom_call.1} parent=31 // pred_region
          %s1078 = ssub.s32 256, 256
          %1079 = vsyncadd %s1070, %s1078
          %s1080 = smul.addr %s27, 2
          %s1081 = smul.addr %s1080, 128
          %s1082 = scalar_lea.hbm %s3, %s1081
          %s1083 = sshll.u32 %s1073, 4
          %s1084 = int_to_ptr.vmem [resolvable:$true] %s1083
          %1089 = dma.vmem_to_hbm [thread:$0]  %s1084, 256, %s1082, %s1070, 128, 128, 8
        $region52: #{tpu_custom_call.1} parent=31 // pred_fallthru
          _
      $region32: #{tpu_custom_call.1} parent=5 // pred_fallthru
        _
      %p1090 = scmp.le.s32.totalorder 2, %s18
      // Predicated region
      $region53: #{tpu_custom_call.1} parent=5 // pred_check
        %p1091 = pneg %p1090
      $region54: #{tpu_custom_call.1} parent=5 // pred_check_branch
        %1093 = sbr.rel (%p1091) target = $region56
      $region55: #{tpu_custom_call.1} parent=5 // pred_region
        %s1094 = ssub.s32 %s18, 2
        // Predicated region
        $region57: #{tpu_custom_call.1} parent=55 // pred_check
          %p1095 = pneg %p155
        $region58: #{tpu_custom_call.1} parent=55 // pred_check_branch
          %1097 = sbr.rel (%p1095) target = $region60
        $region59: #{tpu_custom_call.1} parent=55 // pred_region
          %s1098 = sand.u32 %s140, 1
          %s1099 = scalar_lea.sflag [#allocation4], %s1098
          %s1100 = sand.u32 %s140, 1
          %s1101 = smul.addr %s1100, 16
          %s1102 = scalar_lea.vmem [#allocation8], %s1101
          %1103 = dma.done %s1099, 256
        $region60: #{tpu_custom_call.1} parent=55 // pred_fallthru
          _
      $region56: #{tpu_custom_call.1} parent=5 // pred_fallthru
        _
    $region6: #{tpu_custom_call.1} parent=1 // loop_footer
      %s22 = sadd.s32 1, %s18
    $region7: #{tpu_custom_call.1} parent=1 // loop_footer_branch
      %17 = sbr.rel target = $region3
    $region8: #{tpu_custom_call.1} parent=1 // loop_exit
      _
    %1104 = vsyncpa [#allocation3], 1
    %s1105 = scalar_lea.sflag [#allocation3], 1
    %1106 = vsyncpa %s1105, 1
    %1107 = vsyncpa [#allocation6], 1
    %s1108 = scalar_lea.sflag [#allocation6], 1
    %1109 = vsyncpa %s1108, 1
    %1110 = vsyncpa [#allocation4], 1
    %s1111 = scalar_lea.sflag [#allocation4], 1
    %1112 = vsyncpa %s1111, 1

</llo_original>
